<compile_context>
chip_gen: v6e
topology: v6e:2x2x1
jax: 0.10.0
libtpu: 0.0.40
codegen_flags: <defaults>
</compile_context>

<pallas_src>
import math

import jax
import jax.numpy as jnp
from jax import lax
from jax.experimental import pallas as pl
from jax.experimental.pallas import tpu as pltpu

# --- static model configuration (small, consistent with the module) ---------
B = 2                        # batch
C = 4                        # in_planes (features)
T = 16                       # input sequence length (even)
L = T // 2                   # length of each even/odd half (8)
KSIZE = 5                    # args.kernel
HIDDEN = 8                   # args.hidden_size
H = C * HIDDEN               # hidden channels of the first conv (32)
PAD = (KSIZE - 1) // 2 + 1   # ReplicationPad1d amount (3)
LP = L + 2 * PAD             # padded per-element length (14)
L1 = LP - KSIZE + 1          # conv1 output length per element (10)
NEG_SLOPE = 0.01             # LeakyReLU slope

S = 16                       # uniform per-batch lane stride (L, L1, LP all fit in 16)
NL = B * S                   # total lane width of every buffer (32)
D1 = 2 * C * KSIZE + 1       # fused conv1 contraction (tap-major pair taps + ones row) = 41
D2 = 3 * 2 * H + 1           # fused conv2 contraction = 193


# =============================== kernel ======================================
def interactor_kernel(wx_ref, w2_ref, out_ref, zp_buf, m1_buf, m2_buf):
    # Constant ones rows (bias folding); written once, reused by both stages.
    m1_buf[D1 - 1:D1, :] = jnp.ones((1, NL), jnp.float32)
    m2_buf[D2 - 1:D2, :] = jnp.ones((1, NL), jnp.float32)

    def conv_stack(zp, w1, w2):
        # zp: (2C, NL) replication-padded branch pair at per-batch stride S.
        # Fused im2col for conv1: each tap j is one whole-row roll (logical shift by
        # -j == NL-j) covering both branches and both batches, then one store.
        for j in range(KSIZE):
            m1_buf[j * 2 * C:(j + 1) * 2 * C, :] = (
                zp if j == 0 else pltpu.roll(zp, shift=NL - j, axis=1))
        h = jnp.dot(w1, m1_buf[...], preferred_element_type=jnp.float32)   # (2H, NL)
        h = jnp.maximum(h, NEG_SLOPE * h)                                  # LeakyReLU
        # Dropout = identity (eval).  Fused im2col for conv2 (kernel 3), same trick.
        for j in range(3):
            m2_buf[j * 2 * H:(j + 1) * 2 * H, :] = (
                h if j == 0 else pltpu.roll(h, shift=NL - j, axis=1))
        return jnp.tanh(jnp.dot(w2, m2_buf[...], preferred_element_type=jnp.float32))

    xp = wx_ref[0:2 * C, 0:NL]               # [x_even; x_odd], replication-padded
    xa = wx_ref[2 * C:4 * C, 0:NL]           # [x_even; x_odd], unpadded (output-aligned)
    w1_s1 = wx_ref[4 * C:4 * C + 2 * H, :]           # fused conv1 weights, stage phi|psi
    w1_s2 = wx_ref[4 * C + 2 * H:4 * C + 4 * H, :]   # fused conv1 weights, stage P|U

    # Stage 1: fused phi|psi.  Output rows 0..C-1 = psi(x_odd), C..2C-1 = phi(x_even).
    o1 = conv_stack(xp, w1_s1, w2_ref[0:2 * C, :])
    z2 = xa * jnp.exp(o1)                    # rows 0..C-1 = c, rows C..2C-1 = d

    # In-kernel replication pad of (c,d): one rolled full store + 4 edge fix-ups.
    zp_buf[...] = pltpu.roll(z2, shift=PAD, axis=1)
    for b in range(B):
        base = b * S
        zp_buf[:, base:base + PAD] = jnp.broadcast_to(
            z2[:, base:base + 1], (2 * C, PAD))
        zp_buf[:, base + PAD + L:base + S] = jnp.broadcast_to(
            z2[:, base + L - 1:base + L], (2 * C, S - PAD - L))

    # Stage 2: fused P|U.  P's final conv is negated in the packed weights, so
    # (tanh odd) output rows 0..C-1 = U(d) and rows C..2C-1 = -P(c).
    o2 = conv_stack(zp_buf[...], w1_s2, w2_ref[2 * C:4 * C, :])

    out_ref[...] = z2 + o2                   # rows 0..C-1: c+U(d), rows C..2C-1: d-P(c)


# ====================== weight packing (hoist out of the hot path) ===========
def _pack_w1_pair(wA, bA, wB, bB):
    """Block-structured fused conv1 weights (2H, D1).

    Rows 0..H-1 apply branch A to pair channels 0..C-1, rows H..2H-1 apply branch B
    to pair channels C..2C-1.  Column = tap*2C + channel; last column = bias (pairs
    with the ones row of the fused im2col buffer)."""
    z = jnp.zeros((H, C, KSIZE), jnp.float32)
    top = jnp.concatenate([wA, z], axis=1)            # (H, 2C, K)
    bot = jnp.concatenate([z, wB], axis=1)            # (H, 2C, K)
    w = jnp.concatenate([top, bot], axis=0)           # (2H, 2C, K)
    w = jnp.transpose(w, (0, 2, 1)).reshape(2 * H, KSIZE * 2 * C)
    b = jnp.concatenate([bA, bB]).reshape(2 * H, 1)
    return jnp.concatenate([w, b], axis=1)            # (2H, D1)


def _pack_w2_pair(top_spec, bot_spec):
    """Fused conv2 weights (2C, D2).  spec = (w (C,H,3), b (C,), hidden_block, sign):
    hidden_block 0/1 picks which half of the fused conv1 output those rows read;
    sign=-1 folds an output negation through the (odd) tanh."""
    def half(w, b, block, sign):
        z = jnp.zeros((C, H, 3), jnp.float32)
        parts = [z, z]
        parts[block] = sign * w
        wf = jnp.concatenate(parts, axis=1)           # (C, 2H, 3)
        wf = jnp.transpose(wf, (0, 2, 1)).reshape(C, 3 * 2 * H)
        return wf, (sign * b).reshape(C, 1)
    wt, bt = half(*top_spec)
    wb, bb = half(*bot_spec)
    return jnp.concatenate([jnp.concatenate([wt, wb], axis=0),
                            jnp.concatenate([bt, bb], axis=0)], axis=1)   # (2C, D2)


def pack_weights(params):
    """Pack per-branch torch-layout params into the two fused weight slabs (call once)."""
    w_phi, w_psi, w_u, w_p = params
    w1_s1 = _pack_w1_pair(w_phi[0], w_phi[1], w_psi[0], w_psi[1])   # phi<-x_even, psi<-x_odd
    w1_s2 = _pack_w1_pair(w_p[0], w_p[1], w_u[0], w_u[1])           # P<-c, U<-d
    w2_s1 = _pack_w2_pair((w_psi[2], w_psi[3], 1, 1.0),             # rows 0..3: psi(x_odd)
                          (w_phi[2], w_phi[3], 0, 1.0))             # rows 4..7: phi(x_even)
    w2_s2 = _pack_w2_pair((w_u[2], w_u[3], 1, 1.0),                 # rows 0..3: U(d)
                          (w_p[2], w_p[3], 0, -1.0))                # rows 4..7: -P(c)
    w1_slab = jnp.concatenate([w1_s1, w1_s2], axis=0)               # (4H, D1) = (128, 41)
    w2_slab = jnp.concatenate([w2_s1, w2_s2], axis=0)               # (4C, D2) = (16, 193)
    return w1_slab, w2_slab


# =============================== wrapper =====================================
@jax.jit
def interactor_forward(x, w1_slab, w2_slab):
    """x: (B, T, C) float32. Returns (x_even_update, x_odd_update), each (B, C, L)."""
    x = x.astype(jnp.float32)
    xe = jnp.transpose(x[:, ::2, :], (0, 2, 1))       # (B, C, L)
    xo = jnp.transpose(x[:, 1::2, :], (0, 2, 1))      # (B, C, L)
    pair = jnp.concatenate([xe, xo], axis=1)          # (B, 2C, L) rows = [even; odd]
    pair_pad = jnp.pad(pair, ((0, 0), (0, 0), (PAD, PAD)), mode='edge')   # (B, 2C, LP)

    def fold(a):  # (B, 2C, n) -> (2C, B*S): batch b occupies lanes [b*S, b*S+n)
        a = jnp.pad(a, ((0, 0), (0, 0), (0, S - a.shape[-1])))
        return jnp.transpose(a, (1, 0, 2)).reshape(2 * C, NL)

    x_rows = jnp.concatenate([fold(pair_pad), fold(pair)], axis=0)        # (4C, NL)
    x_rows = jnp.pad(x_rows, ((0, 0), (0, D1 - NL)))                      # (4C, D1)
    wx = jnp.concatenate([x_rows, w1_slab], axis=0)                       # (144, D1)

    vmem = pl.BlockSpec(memory_space=pltpu.MemorySpace.VMEM)
    out = pl.pallas_call(
        interactor_kernel,
        out_shape=jax.ShapeDtypeStruct((2 * C, NL), jnp.float32),
        in_specs=[vmem, vmem],
        out_specs=vmem,
        scratch_shapes=[
            pltpu.VMEM((2 * C, NL), jnp.float32),     # zp_buf (padded (c,d) pair)
            pltpu.VMEM((D1, NL), jnp.float32),        # m1_buf fused im2col + ones row
            pltpu.VMEM((D2, NL), jnp.float32),        # m2_buf fused im2col + ones row
        ],
    )(wx, w2_slab)

    out = out.reshape(2 * C, B, S)[:, :, :L]          # strip the stride-16 junk lanes
    x_even_update = jnp.transpose(out[:C], (1, 0, 2))     # (B, C, L)
    x_odd_update = jnp.transpose(out[C:], (1, 0, 2))      # (B, C, L)
    return x_even_update, x_odd_update


# ====================== deterministic parameter init =========================
def init_params(key):
    def branch_params(k):
        k1, k2, k3, k4 = jax.random.split(k, 4)
        w1 = jax.random.normal(k1, (H, C, KSIZE), jnp.float32) / math.sqrt(C * KSIZE)
        b1 = 0.1 * jax.random.normal(k2, (H,), jnp.float32)
        w2 = jax.random.normal(k3, (C, H, 3), jnp.float32) / math.sqrt(H * 3)
        b2 = 0.1 * jax.random.normal(k4, (C,), jnp.float32)
        return w1, b1, w2, b2

    k_phi, k_psi, k_u, k_p = jax.random.split(key, 4)
    return (branch_params(k_phi), branch_params(k_psi),
            branch_params(k_u), branch_params(k_p))


# ========================= pure-JAX reference ================================
def ref_forward(x, params):
    w_phi, w_psi, w_u, w_p = params

    def branch(z, pr):                                # z: (B, C, L)
        w1, b1, w2, b2 = pr
        zp = jnp.pad(z, ((0, 0), (0, 0), (PAD, PAD)), mode='edge')
        h = lax.conv_general_dilated(zp, w1, (1,), 'VALID',
                                     dimension_numbers=('NCH', 'OIH', 'NCH'))
        h = h + b1[None, :, None]
        h = jnp.where(h >= 0, h, NEG_SLOPE * h)
        o = lax.conv_general_dilated(h, w2, (1,), 'VALID',
                                     dimension_numbers=('NCH', 'OIH', 'NCH'))
        o = o + b2[None, :, None]
        return jnp.tanh(o)

    xe = jnp.transpose(x[:, ::2, :], (0, 2, 1))
    xo = jnp.transpose(x[:, 1::2, :], (0, 2, 1))
    d = xo * jnp.exp(branch(xe, w_phi))
    c = xe * jnp.exp(branch(xo, w_psi))
    x_even_update = c + branch(d, w_u)
    x_odd_update = d - branch(c, w_p)
    return x_even_update, x_odd_update


# ================================ main =======================================
if __name__ == "__main__":
    key = jax.random.PRNGKey(0)
    kx, kp = jax.random.split(key)
    x = jax.random.normal(kx, (B, T, C), jnp.float32)
    params = init_params(kp)

    # Weight packing hoisted out of the per-call path (computed once).
    w1_slab, w2_slab = pack_weights(params)

    out_even, out_odd = interactor_forward(x, w1_slab, w2_slab)
    jax.block_until_ready((out_even, out_odd))

    ref_even, ref_odd = ref_forward(x, params)
    assert out_even.shape == (B, C, L) and out_odd.shape == (B, C, L)
    assert jnp.allclose(out_even, ref_even, atol=1e-4, rtol=1e-4)
    assert jnp.allclose(out_odd, ref_odd, atol=1e-4, rtol=1e-4)

    print("KERNEL_OK")
</pallas_src>

<mosaic_0001>
module attributes {stable_mosaic.version = 11 : i64} {
  func.func @interactor_kernel(%arg0: memref<144x41xf32, #tpu.memory_space<vmem>>, %arg1: memref<16x193xf32, #tpu.memory_space<vmem>>, %arg2: memref<8x32xf32, #tpu.memory_space<vmem>>, %arg3: memref<8x32xf32, #tpu.memory_space<vmem>>, %arg4: memref<41x32xf32, #tpu.memory_space<vmem>>, %arg5: memref<193x32xf32, #tpu.memory_space<vmem>>) attributes {dimension_semantics = [], scalar_prefetch = 0 : i64, scratch_operands = 3 : i64, tpu.core_type = #tpu.core_type<tc>} {
    %cst = arith.constant 1.000000e+00 : f32
    %0 = vector.broadcast %cst : f32 to vector<1x32xf32>
    %c40 = arith.constant 40 : index
    %c0 = arith.constant 0 : index
    %1 = vector.load %arg4[%c40, %c0] : memref<41x32xf32, #tpu.memory_space<vmem>>, vector<1x32xf32>
    tpu.vector_store %arg4[%c40, %c0], %0 {strides = array<i32>} : memref<41x32xf32, #tpu.memory_space<vmem>>, vector<1x32xf32>,
    %cst_0 = arith.constant 1.000000e+00 : f32
    %2 = vector.broadcast %cst_0 : f32 to vector<1x32xf32>
    %c192 = arith.constant 192 : index
    %c0_1 = arith.constant 0 : index
    %3 = vector.load %arg5[%c192, %c0_1] : memref<193x32xf32, #tpu.memory_space<vmem>>, vector<1x32xf32>
    tpu.vector_store %arg5[%c192, %c0_1], %2 {strides = array<i32>} : memref<193x32xf32, #tpu.memory_space<vmem>>, vector<1x32xf32>,
    %c0_2 = arith.constant 0 : index
    %c0_3 = arith.constant 0 : index
    %4 = vector.load %arg0[%c0_2, %c0_3] : memref<144x41xf32, #tpu.memory_space<vmem>>, vector<8x32xf32>
    %c8 = arith.constant 8 : index
    %c0_4 = arith.constant 0 : index
    %5 = vector.load %arg0[%c8, %c0_4] : memref<144x41xf32, #tpu.memory_space<vmem>>, vector<8x32xf32>
    %c16 = arith.constant 16 : index
    %c0_5 = arith.constant 0 : index
    %6 = vector.load %arg0[%c16, %c0_5] : memref<144x41xf32, #tpu.memory_space<vmem>>, vector<64x41xf32>
    %c80 = arith.constant 80 : index
    %c0_6 = arith.constant 0 : index
    %7 = vector.load %arg0[%c80, %c0_6] : memref<144x41xf32, #tpu.memory_space<vmem>>, vector<64x41xf32>
    %c0_7 = arith.constant 0 : index
    %c0_8 = arith.constant 0 : index
    %8 = vector.load %arg1[%c0_7, %c0_8] : memref<16x193xf32, #tpu.memory_space<vmem>>, vector<8x193xf32>
    %c0_9 = arith.constant 0 : index
    %c0_10 = arith.constant 0 : index
    %9 = vector.load %arg4[%c0_9, %c0_10] : memref<41x32xf32, #tpu.memory_space<vmem>>, vector<8x32xf32>
    tpu.vector_store %arg4[%c0_9, %c0_10], %4 {strides = array<i32>} : memref<41x32xf32, #tpu.memory_space<vmem>>, vector<8x32xf32>,
    %c31_i32 = arith.constant 31 : i32
    %10 = tpu.dynamic_rotate %4 by %c31_i32 dim 1 : vector<8x32xf32>, i32 -> vector<8x32xf32>
    %c8_11 = arith.constant 8 : index
    %c0_12 = arith.constant 0 : index
    %11 = vector.load %arg4[%c8_11, %c0_12] : memref<41x32xf32, #tpu.memory_space<vmem>>, vector<8x32xf32>
    tpu.vector_store %arg4[%c8_11, %c0_12], %10 {strides = array<i32>} : memref<41x32xf32, #tpu.memory_space<vmem>>, vector<8x32xf32>,
    %c30_i32 = arith.constant 30 : i32
    %12 = tpu.dynamic_rotate %4 by %c30_i32 dim 1 : vector<8x32xf32>, i32 -> vector<8x32xf32>
    %c16_13 = arith.constant 16 : index
    %c0_14 = arith.constant 0 : index
    %13 = vector.load %arg4[%c16_13, %c0_14] : memref<41x32xf32, #tpu.memory_space<vmem>>, vector<8x32xf32>
    tpu.vector_store %arg4[%c16_13, %c0_14], %12 {strides = array<i32>} : memref<41x32xf32, #tpu.memory_space<vmem>>, vector<8x32xf32>,
    %c29_i32 = arith.constant 29 : i32
    %14 = tpu.dynamic_rotate %4 by %c29_i32 dim 1 : vector<8x32xf32>, i32 -> vector<8x32xf32>
    %c24 = arith.constant 24 : index
    %c0_15 = arith.constant 0 : index
    %15 = vector.load %arg4[%c24, %c0_15] : memref<41x32xf32, #tpu.memory_space<vmem>>, vector<8x32xf32>
    tpu.vector_store %arg4[%c24, %c0_15], %14 {strides = array<i32>} : memref<41x32xf32, #tpu.memory_space<vmem>>, vector<8x32xf32>,
    %c28_i32 = arith.constant 28 : i32
    %16 = tpu.dynamic_rotate %4 by %c28_i32 dim 1 : vector<8x32xf32>, i32 -> vector<8x32xf32>
    %c32 = arith.constant 32 : index
    %c0_16 = arith.constant 0 : index
    %17 = vector.load %arg4[%c32, %c0_16] : memref<41x32xf32, #tpu.memory_space<vmem>>, vector<8x32xf32>
    tpu.vector_store %arg4[%c32, %c0_16], %16 {strides = array<i32>} : memref<41x32xf32, #tpu.memory_space<vmem>>, vector<8x32xf32>,
    %c0_17 = arith.constant 0 : index
    %c0_18 = arith.constant 0 : index
    %18 = vector.load %arg4[%c0_17, %c0_18] : memref<41x32xf32, #tpu.memory_space<vmem>>, vector<41x32xf32>
    %cst_19 = arith.constant dense<0.000000e+00> : vector<64x32xf32>
    %19 = tpu.matmul %6, %18, %cst_19 {dimension_numbers = #tpu.dot_dimension_numbers<[1], [0], [0], [1], [0, 0, 1, 1], [], []>} : vector<64x41xf32>, vector<41x32xf32>, vector<64x32xf32> -> vector<64x32xf32>
    %cst_20 = arith.constant 0.00999999977 : f32
    %20 = vector.broadcast %cst_20 : f32 to vector<64x32xf32>
    %21 = arith.mulf %20, %19 : vector<64x32xf32>
    %22 = arith.maximumf %19, %21 : vector<64x32xf32>
    %c0_21 = arith.constant 0 : index
    %c0_22 = arith.constant 0 : index
    %23 = vector.load %arg5[%c0_21, %c0_22] : memref<193x32xf32, #tpu.memory_space<vmem>>, vector<64x32xf32>
    tpu.vector_store %arg5[%c0_21, %c0_22], %22 {strides = array<i32>} : memref<193x32xf32, #tpu.memory_space<vmem>>, vector<64x32xf32>,
    %c31_i32_23 = arith.constant 31 : i32
    %24 = tpu.dynamic_rotate %22 by %c31_i32_23 dim 1 : vector<64x32xf32>, i32 -> vector<64x32xf32>
    %c64 = arith.constant 64 : index
    %c0_24 = arith.constant 0 : index
    %25 = vector.load %arg5[%c64, %c0_24] : memref<193x32xf32, #tpu.memory_space<vmem>>, vector<64x32xf32>
    tpu.vector_store %arg5[%c64, %c0_24], %24 {strides = array<i32>} : memref<193x32xf32, #tpu.memory_space<vmem>>, vector<64x32xf32>,
    %c30_i32_25 = arith.constant 30 : i32
    %26 = tpu.dynamic_rotate %22 by %c30_i32_25 dim 1 : vector<64x32xf32>, i32 -> vector<64x32xf32>
    %c128 = arith.constant 128 : index
    %c0_26 = arith.constant 0 : index
    %27 = vector.load %arg5[%c128, %c0_26] : memref<193x32xf32, #tpu.memory_space<vmem>>, vector<64x32xf32>
    tpu.vector_store %arg5[%c128, %c0_26], %26 {strides = array<i32>} : memref<193x32xf32, #tpu.memory_space<vmem>>, vector<64x32xf32>,
    %c0_27 = arith.constant 0 : index
    %c0_28 = arith.constant 0 : index
    %28 = vector.load %arg5[%c0_27, %c0_28] : memref<193x32xf32, #tpu.memory_space<vmem>>, vector<193x32xf32>
    %cst_29 = arith.constant dense<0.000000e+00> : vector<8x32xf32>
    %29 = tpu.matmul %8, %28, %cst_29 {dimension_numbers = #tpu.dot_dimension_numbers<[1], [0], [0], [1], [0, 0, 1, 1], [], []>} : vector<8x193xf32>, vector<193x32xf32>, vector<8x32xf32> -> vector<8x32xf32>
    %30 = math.tanh %29 : vector<8x32xf32>
    %31 = math.exp %30 : vector<8x32xf32>
    %32 = arith.mulf %5, %31 : vector<8x32xf32>
    %c3_i32 = arith.constant 3 : i32
    %33 = tpu.dynamic_rotate %32 by %c3_i32 dim 1 : vector<8x32xf32>, i32 -> vector<8x32xf32>
    %c0_30 = arith.constant 0 : index
    %c0_31 = arith.constant 0 : index
    %34 = vector.load %arg3[%c0_30, %c0_31] : memref<8x32xf32, #tpu.memory_space<vmem>>, vector<8x32xf32>
    tpu.vector_store %arg3[%c0_30, %c0_31], %33 {strides = array<i32>} : memref<8x32xf32, #tpu.memory_space<vmem>>, vector<8x32xf32>,
    %35 = vector.extract_strided_slice %32 {offsets = [0, 0], sizes = [8, 1], strides = [1, 1]} : vector<8x32xf32> to vector<8x1xf32>
    %36 = vector.shape_cast %35 : vector<8x1xf32> to vector<8x1xf32>
    %37 = vector.broadcast %36 : vector<8x1xf32> to vector<8x3xf32>
    %c0_32 = arith.constant 0 : index
    %c0_33 = arith.constant 0 : index
    %38 = vector.load %arg3[%c0_32, %c0_33] : memref<8x32xf32, #tpu.memory_space<vmem>>, vector<8x3xf32>
    tpu.vector_store %arg3[%c0_32, %c0_33], %37 {strides = array<i32>} : memref<8x32xf32, #tpu.memory_space<vmem>>, vector<8x3xf32>,
    %39 = vector.extract_strided_slice %32 {offsets = [0, 7], sizes = [8, 1], strides = [1, 1]} : vector<8x32xf32> to vector<8x1xf32>
    %40 = vector.shape_cast %39 : vector<8x1xf32> to vector<8x1xf32>
    %41 = vector.broadcast %40 : vector<8x1xf32> to vector<8x5xf32>
    %c0_34 = arith.constant 0 : index
    %c11 = arith.constant 11 : index
    %42 = vector.load %arg3[%c0_34, %c11] : memref<8x32xf32, #tpu.memory_space<vmem>>, vector<8x5xf32>
    tpu.vector_store %arg3[%c0_34, %c11], %41 {strides = array<i32>} : memref<8x32xf32, #tpu.memory_space<vmem>>, vector<8x5xf32>,
    %43 = vector.extract_strided_slice %32 {offsets = [0, 16], sizes = [8, 1], strides = [1, 1]} : vector<8x32xf32> to vector<8x1xf32>
    %44 = vector.shape_cast %43 : vector<8x1xf32> to vector<8x1xf32>
    %45 = vector.broadcast %44 : vector<8x1xf32> to vector<8x3xf32>
    %c0_35 = arith.constant 0 : index
    %c16_36 = arith.constant 16 : index
    %46 = vector.load %arg3[%c0_35, %c16_36] : memref<8x32xf32, #tpu.memory_space<vmem>>, vector<8x3xf32>
    tpu.vector_store %arg3[%c0_35, %c16_36], %45 {strides = array<i32>} : memref<8x32xf32, #tpu.memory_space<vmem>>, vector<8x3xf32>,
    %47 = vector.extract_strided_slice %32 {offsets = [0, 23], sizes = [8, 1], strides = [1, 1]} : vector<8x32xf32> to vector<8x1xf32>
    %48 = vector.shape_cast %47 : vector<8x1xf32> to vector<8x1xf32>
    %49 = vector.broadcast %48 : vector<8x1xf32> to vector<8x5xf32>
    %c0_37 = arith.constant 0 : index
    %c27 = arith.constant 27 : index
    %50 = vector.load %arg3[%c0_37, %c27] : memref<8x32xf32, #tpu.memory_space<vmem>>, vector<8x5xf32>
    tpu.vector_store %arg3[%c0_37, %c27], %49 {strides = array<i32>} : memref<8x32xf32, #tpu.memory_space<vmem>>, vector<8x5xf32>,
    %c0_38 = arith.constant 0 : index
    %c0_39 = arith.constant 0 : index
    %51 = vector.load %arg3[%c0_38, %c0_39] : memref<8x32xf32, #tpu.memory_space<vmem>>, vector<8x32xf32>
    %c8_40 = arith.constant 8 : index
    %c0_41 = arith.constant 0 : index
    %52 = vector.load %arg1[%c8_40, %c0_41] : memref<16x193xf32, #tpu.memory_space<vmem>>, vector<8x193xf32>
    %c0_42 = arith.constant 0 : index
    %c0_43 = arith.constant 0 : index
    %53 = vector.load %arg4[%c0_42, %c0_43] : memref<41x32xf32, #tpu.memory_space<vmem>>, vector<8x32xf32>
    tpu.vector_store %arg4[%c0_42, %c0_43], %51 {strides = array<i32>} : memref<41x32xf32, #tpu.memory_space<vmem>>, vector<8x32xf32>,
    %c31_i32_44 = arith.constant 31 : i32
    %54 = tpu.dynamic_rotate %51 by %c31_i32_44 dim 1 : vector<8x32xf32>, i32 -> vector<8x32xf32>
    %c8_45 = arith.constant 8 : index
    %c0_46 = arith.constant 0 : index
    %55 = vector.load %arg4[%c8_45, %c0_46] : memref<41x32xf32, #tpu.memory_space<vmem>>, vector<8x32xf32>
    tpu.vector_store %arg4[%c8_45, %c0_46], %54 {strides = array<i32>} : memref<41x32xf32, #tpu.memory_space<vmem>>, vector<8x32xf32>,
    %c30_i32_47 = arith.constant 30 : i32
    %56 = tpu.dynamic_rotate %51 by %c30_i32_47 dim 1 : vector<8x32xf32>, i32 -> vector<8x32xf32>
    %c16_48 = arith.constant 16 : index
    %c0_49 = arith.constant 0 : index
    %57 = vector.load %arg4[%c16_48, %c0_49] : memref<41x32xf32, #tpu.memory_space<vmem>>, vector<8x32xf32>
    tpu.vector_store %arg4[%c16_48, %c0_49], %56 {strides = array<i32>} : memref<41x32xf32, #tpu.memory_space<vmem>>, vector<8x32xf32>,
    %c29_i32_50 = arith.constant 29 : i32
    %58 = tpu.dynamic_rotate %51 by %c29_i32_50 dim 1 : vector<8x32xf32>, i32 -> vector<8x32xf32>
    %c24_51 = arith.constant 24 : index
    %c0_52 = arith.constant 0 : index
    %59 = vector.load %arg4[%c24_51, %c0_52] : memref<41x32xf32, #tpu.memory_space<vmem>>, vector<8x32xf32>
    tpu.vector_store %arg4[%c24_51, %c0_52], %58 {strides = array<i32>} : memref<41x32xf32, #tpu.memory_space<vmem>>, vector<8x32xf32>,
    %c28_i32_53 = arith.constant 28 : i32
    %60 = tpu.dynamic_rotate %51 by %c28_i32_53 dim 1 : vector<8x32xf32>, i32 -> vector<8x32xf32>
    %c32_54 = arith.constant 32 : index
    %c0_55 = arith.constant 0 : index
    %61 = vector.load %arg4[%c32_54, %c0_55] : memref<41x32xf32, #tpu.memory_space<vmem>>, vector<8x32xf32>
    tpu.vector_store %arg4[%c32_54, %c0_55], %60 {strides = array<i32>} : memref<41x32xf32, #tpu.memory_space<vmem>>, vector<8x32xf32>,
    %c0_56 = arith.constant 0 : index
    %c0_57 = arith.constant 0 : index
    %62 = vector.load %arg4[%c0_56, %c0_57] : memref<41x32xf32, #tpu.memory_space<vmem>>, vector<41x32xf32>
    %cst_58 = arith.constant dense<0.000000e+00> : vector<64x32xf32>
    %63 = tpu.matmul %7, %62, %cst_58 {dimension_numbers = #tpu.dot_dimension_numbers<[1], [0], [0], [1], [0, 0, 1, 1], [], []>} : vector<64x41xf32>, vector<41x32xf32>, vector<64x32xf32> -> vector<64x32xf32>
    %cst_59 = arith.constant 0.00999999977 : f32
    %64 = vector.broadcast %cst_59 : f32 to vector<64x32xf32>
    %65 = arith.mulf %64, %63 : vector<64x32xf32>
    %66 = arith.maximumf %63, %65 : vector<64x32xf32>
    %c0_60 = arith.constant 0 : index
    %c0_61 = arith.constant 0 : index
    %67 = vector.load %arg5[%c0_60, %c0_61] : memref<193x32xf32, #tpu.memory_space<vmem>>, vector<64x32xf32>
    tpu.vector_store %arg5[%c0_60, %c0_61], %66 {strides = array<i32>} : memref<193x32xf32, #tpu.memory_space<vmem>>, vector<64x32xf32>,
    %c31_i32_62 = arith.constant 31 : i32
    %68 = tpu.dynamic_rotate %66 by %c31_i32_62 dim 1 : vector<64x32xf32>, i32 -> vector<64x32xf32>
    %c64_63 = arith.constant 64 : index
    %c0_64 = arith.constant 0 : index
    %69 = vector.load %arg5[%c64_63, %c0_64] : memref<193x32xf32, #tpu.memory_space<vmem>>, vector<64x32xf32>
    tpu.vector_store %arg5[%c64_63, %c0_64], %68 {strides = array<i32>} : memref<193x32xf32, #tpu.memory_space<vmem>>, vector<64x32xf32>,
    %c30_i32_65 = arith.constant 30 : i32
    %70 = tpu.dynamic_rotate %66 by %c30_i32_65 dim 1 : vector<64x32xf32>, i32 -> vector<64x32xf32>
    %c128_66 = arith.constant 128 : index
    %c0_67 = arith.constant 0 : index
    %71 = vector.load %arg5[%c128_66, %c0_67] : memref<193x32xf32, #tpu.memory_space<vmem>>, vector<64x32xf32>
    tpu.vector_store %arg5[%c128_66, %c0_67], %70 {strides = array<i32>} : memref<193x32xf32, #tpu.memory_space<vmem>>, vector<64x32xf32>,
    %c0_68 = arith.constant 0 : index
    %c0_69 = arith.constant 0 : index
    %72 = vector.load %arg5[%c0_68, %c0_69] : memref<193x32xf32, #tpu.memory_space<vmem>>, vector<193x32xf32>
    %cst_70 = arith.constant dense<0.000000e+00> : vector<8x32xf32>
    %73 = tpu.matmul %52, %72, %cst_70 {dimension_numbers = #tpu.dot_dimension_numbers<[1], [0], [0], [1], [0, 0, 1, 1], [], []>} : vector<8x193xf32>, vector<193x32xf32>, vector<8x32xf32> -> vector<8x32xf32>
    %74 = math.tanh %73 : vector<8x32xf32>
    %75 = arith.addf %32, %74 : vector<8x32xf32>
    %c0_71 = arith.constant 0 : index
    %c0_72 = arith.constant 0 : index
    %76 = vector.load %arg2[%c0_71, %c0_72] : memref<8x32xf32, #tpu.memory_space<vmem>>, vector<8x32xf32>
    tpu.vector_store %arg2[%c0_71, %c0_72], %75 {strides = array<i32>} : memref<8x32xf32, #tpu.memory_space<vmem>>, vector<8x32xf32>,
    return
  }
}

</mosaic_0001>

<llo_original>
// kernel: interactor_forward.1
$region0: #{interactor_forward.1}
  #allocation0 [shape = 'u32[]', space=smem, size = 0x4, offset = 0x4, fixed_abs, tag = 'smem constant byte address 0x4 - core index']
  #allocation1 [shape = 'u32[144,128]{1,0:T(1,128)}', space=vmem, size = 0x12000, scoped, tag = 'internal scratch']
  #allocation2 [shape = 'f32[8,32]{1,0:T(8,128)}', space=vmem, size = 0x1000, scoped, tag = 'scratch operand']
  #allocation3 [shape = 'f32[41,32]{1,0:T(8,128)}', space=vmem, size = 0x6000, scoped, tag = 'scratch operand']
  #allocation4 [shape = 'f32[193,32]{1,0:T(8,128)}', space=vmem, size = 0x19000, scoped, tag = 'scratch operand']
  %s0 = inlined_call_operand.vmem [shape: f32[144,41], index: 0, kind: input, shape index: {}]
  %s1 = inlined_call_operand.vmem [shape: f32[16,193], index: 1, kind: input, shape index: {}]
  %s2 = inlined_call_operand.vmem [shape: f32[8,32], index: 2, kind: output, shape index: {}]
  %s3 = sld [smem:[#allocation0]]
  $region18: #{interactor_forward.1} parent=0
    _
  %s5 = ssub.s32 1, %s3
  %s6 = scalar_select 0, %s5, %s3
  // Predicated region
  $region2: #{interactor_forward.1} parent=0 // pred_check
    _
  $region3: #{interactor_forward.1} parent=0 // pred_check_branch
    %8 = sbr.rel (0) target = $region5
  $region4: #{interactor_forward.1} parent=0 // pred_region
    _
  $region5: #{interactor_forward.1} parent=0 // pred_fallthru
    _
  // Predicated region
  $region6: #{interactor_forward.1} parent=0 // pred_check
    _
  $region7: #{interactor_forward.1} parent=0 // pred_check_branch
    %10 = sbr.rel (0) target = $region9
  $region8: #{interactor_forward.1} parent=0 // pred_region
    _
  $region9: #{interactor_forward.1} parent=0 // pred_fallthru
    _
  %vm11 = vcmask 253952
  %12 = vst.msk [vmem:[#allocation3 + $0x28] sm:$0x1] %vm11, 1.0
  %13 = vst.msk [vmem:[#allocation4 + $0xc0] sm:$0x1] %vm11, 1.0
  %v14 = vld [vmem:[%s0] sm:$0xff]
  %v15 = vld [vmem:[%s0 + $0x8] sm:$0xff]
  %v16 = vld [vmem:[%s0 + $0x10] sm:$0xff]
  %v17 = vld [vmem:[%s0 + $0x18] sm:$0xff]
  %v18 = vld [vmem:[%s0 + $0x20] sm:$0xff]
  %v19 = vld [vmem:[%s0 + $0x28] sm:$0xff]
  %v20 = vld [vmem:[%s0 + $0x30] sm:$0xff]
  %v21 = vld [vmem:[%s0 + $0x38] sm:$0xff]
  %v22 = vld [vmem:[%s0 + $0x40] sm:$0xff]
  %v23 = vld [vmem:[%s0 + $0x48] sm:$0xff]
  %v24 = vld [vmem:[%s0 + $0x50] sm:$0xff]
  %v25 = vld [vmem:[%s0 + $0x58] sm:$0xff]
  %v26 = vld [vmem:[%s0 + $0x60] sm:$0xff]
  %v27 = vld [vmem:[%s0 + $0x68] sm:$0xff]
  %v28 = vld [vmem:[%s0 + $0x70] sm:$0xff]
  %v29 = vld [vmem:[%s0 + $0x78] sm:$0xff]
  %v30 = vld [vmem:[%s0 + $0x80] sm:$0xff]
  %v31 = vld [vmem:[%s0 + $0x88] sm:$0xff]
  %v32 = vld [vmem:[%s1] sm:$0xff]
  %v33 = vld [vmem:[%s1 + $0x8] sm:$0xff]
  %vm34 = vcmask 261120
  %35 = vst.msk [vmem:[#allocation3] sm:$0xff] %vm34, %v14
  %vm36 = vcmask 1047808
  %37 = vrot.lane.b32.xlu0 %v14, 32
  %v38 = vpop.permute.xlu0 %37
  %v39 = vsel %vm36, %v38, %v14
  %40 = vrot.lane.b32.xlu0 %v39, 32
  %v41 = vpop.permute.xlu0 %40
  %v42 = vsel %vm36, %v41, %v14
  %44 = vrot.lane.b32.xlu0 %v42, 127
  %v45 = vpop.permute.xlu0 %44
  %47 = vst.msk [vmem:[#allocation3 + $0x8] sm:$0xff] %vm34, %v45
  %48 = vrot.lane.b32.xlu0 %v42, 126
  %v49 = vpop.permute.xlu0 %48
  %51 = vst.msk [vmem:[#allocation3 + $0x10] sm:$0xff] %vm34, %v49
  %52 = vrot.lane.b32.xlu0 %v42, 125
  %v53 = vpop.permute.xlu0 %52
  %55 = vst.msk [vmem:[#allocation3 + $0x18] sm:$0xff] %vm34, %v53
  %56 = vrot.lane.b32.xlu0 %v42, 124
  %v57 = vpop.permute.xlu0 %56
  %59 = vst.msk [vmem:[#allocation3 + $0x20] sm:$0xff] %vm34, %v57
  %v60 = vld [vmem:[#allocation3] sm:$0xff]
  %v61 = vld [vmem:[#allocation3 + $0x8] sm:$0xff]
  %v62 = vld [vmem:[#allocation3 + $0x10] sm:$0xff]
  %v63 = vld [vmem:[#allocation3 + $0x18] sm:$0xff]
  %v64 = vld [vmem:[#allocation3 + $0x20] sm:$0xff]
  %v65 = vld [vmem:[#allocation3 + $0x28] sm:$0x1]
  %vm66 = vcmask 334848
  %v68 = vsel %vm66, %v16, 0
  %v71 = vsel %vm66, %v17, 0
  %v74 = vsel %vm66, %v18, 0
  %v77 = vsel %vm66, %v19, 0
  %v80 = vsel %vm66, %v20, 0
  %v83 = vsel %vm66, %v21, 0
  %v86 = vsel %vm66, %v22, 0
  %v89 = vsel %vm66, %v23, 0
  %vm91 = vcmask 1040384
  %v93 = vsel %vm91, %v65, 0
  %95 = vmatprep.subr.mxu0 0.0
  %96 = vmatpush1.msra.mxu0 0.0
  %97 = vmatprep.subr.mxu0 0.0
  %98 = vmatpush1.msra.mxu0 0.0
  %99 = vmatprep.subr.mxu0 0.0
  %100 = vmatpush1.msra.mxu0 0.0
  %101 = vmatprep.subr.mxu0 0.0
  %102 = vmatpush1.msra.mxu0 0.0
  %103 = vmatprep.subr.mxu0 0.0
  %104 = vmatpush1.msra.mxu0 0.0
  %105 = vmatprep.subr.mxu0 0.0
  %106 = vmatpush1.msra.mxu0 0.0
  %107 = vmatprep.subr.mxu0 0.0
  %108 = vmatpush1.msra.mxu0 0.0
  %109 = vmatprep.subr.mxu0 0.0
  %110 = vmatpush1.msra.mxu0 0.0
  %111 = vmatprep.subr.mxu0 0.0
  %112 = vmatpush1.msra.mxu0 0.0
  %113 = vmatprep.subr.mxu0 0.0
  %114 = vmatpush1.msra.mxu0 0.0
  %115 = vmatprep.subr.mxu0 0.0
  %116 = vmatpush1.msra.mxu0 %v93
  %117 = vmatprep.subr.mxu0 0.0
  %118 = vmatpush1.msra.mxu0 %v64
  %119 = vmatprep.subr.mxu0 0.0
  %120 = vmatpush1.msra.mxu0 %v63
  %121 = vmatprep.subr.mxu0 0.0
  %122 = vmatpush1.msra.mxu0 %v62
  %123 = vmatprep.subr.mxu0 0.0
  %124 = vmatpush1.msra.mxu0 %v61
  %125 = vmatprep.subr.mxu0 0.0
  %126 = vmatpush1.msra.mxu0 %v60
  %127 = vmatprep.subr.mxu0 0.0
  %128 = vmatpush2.msra.mxu0 0.0
  %129 = vmatprep.subr.mxu0 0.0
  %130 = vmatpush2.msra.mxu0 0.0
  %131 = vmatprep.subr.mxu0 0.0
  %132 = vmatpush2.msra.mxu0 0.0
  %133 = vmatprep.subr.mxu0 0.0
  %134 = vmatpush2.msra.mxu0 0.0
  %135 = vmatprep.subr.mxu0 0.0
  %136 = vmatpush2.msra.mxu0 0.0
  %137 = vmatprep.subr.mxu0 0.0
  %138 = vmatpush2.msra.mxu0 0.0
  %139 = vmatprep.subr.mxu0 0.0
  %140 = vmatpush2.msra.mxu0 0.0
  %141 = vmatprep.subr.mxu0 0.0
  %142 = vmatpush2.msra.mxu0 0.0
  %143 = vmatprep.subr.mxu0 0.0
  %144 = vmatpush2.msra.mxu0 0.0
  %145 = vmatprep.subr.mxu0 0.0
  %146 = vmatpush2.msra.mxu0 0.0
  %147 = vmatprep.subr.mxu0 0.0
  %148 = vmatpush2.msra.mxu0 0.0
  %149 = vmatprep.subr.mxu0 0.0
  %150 = vmatpush2.msra.mxu0 0.0
  %151 = vmatprep.subr.mxu0 0.0
  %152 = vmatpush2.msra.mxu0 0.0
  %153 = vmatprep.subr.mxu0 0.0
  %154 = vmatpush2.msra.mxu0 0.0
  %155 = vmatprep.subr.mxu0 0.0
  %156 = vmatpush2.msra.mxu0 0.0
  %157 = vmatprep.subr.mxu0 0.0
  %158 = vmatpush2.msra.mxu0 0.0
  %159 = vmatprep.mubr.f32.mxu0 0.0
  %160 = vmatmul.mubr.f32.gmra.mxu0 %v68
  %v161 = vpop.f32.mrf.mxu0
  %v162 = vadd.f32 0.0, %v161
  %v163 = vpop.f32.mrf.mxu0
  %164 = vmatprep.mubr.f32.mxu0 0.0
  %165 = vmatmul.mubr.f32.gmra.mxu0 %v71
  %v166 = vpop.f32.mrf.mxu0
  %v167 = vadd.f32 0.0, %v166
  %v168 = vpop.f32.mrf.mxu0
  %169 = vmatprep.mubr.f32.mxu0 0.0
  %170 = vmatmul.mubr.f32.gmra.mxu0 %v74
  %v171 = vpop.f32.mrf.mxu0
  %v172 = vadd.f32 0.0, %v171
  %v173 = vpop.f32.mrf.mxu0
  %174 = vmatprep.mubr.f32.mxu0 0.0
  %175 = vmatmul.mubr.f32.gmra.mxu0 %v77
  %v176 = vpop.f32.mrf.mxu0
  %v177 = vadd.f32 0.0, %v176
  %v178 = vpop.f32.mrf.mxu0
  %179 = vmatprep.mubr.f32.mxu0 0.0
  %180 = vmatmul.mubr.f32.gmra.mxu0 %v80
  %v181 = vpop.f32.mrf.mxu0
  %v182 = vadd.f32 0.0, %v181
  %v183 = vpop.f32.mrf.mxu0
  %184 = vmatprep.mubr.f32.mxu0 0.0
  %185 = vmatmul.mubr.f32.gmra.mxu0 %v83
  %v186 = vpop.f32.mrf.mxu0
  %v187 = vadd.f32 0.0, %v186
  %v188 = vpop.f32.mrf.mxu0
  %189 = vmatprep.mubr.f32.mxu0 0.0
  %190 = vmatmul.mubr.f32.gmra.mxu0 %v86
  %v191 = vpop.f32.mrf.mxu0
  %v192 = vadd.f32 0.0, %v191
  %v193 = vpop.f32.mrf.mxu0
  %194 = vmatprep.mubr.f32.mxu0 0.0
  %195 = vmatmul.mubr.f32.gmra.mxu0 %v89
  %v196 = vpop.f32.mrf.mxu0
  %v197 = vadd.f32 0.0, %v196
  %v198 = vpop.f32.mrf.mxu0
  %199 = vdwg.mxu0
  %v200 = vmul.f32 %v162, 0.01
  %v201 = vmul.f32 %v167, 0.01
  %v202 = vmul.f32 %v172, 0.01
  %v203 = vmul.f32 %v177, 0.01
  %v204 = vmul.f32 %v182, 0.01
  %v205 = vmul.f32 %v187, 0.01
  %v206 = vmul.f32 %v192, 0.01
  %v207 = vmul.f32 %v197, 0.01
  %v208 = vmax.f32 %v162, %v200
  %v209 = vmax.f32 %v167, %v201
  %v210 = vmax.f32 %v172, %v202
  %v211 = vmax.f32 %v177, %v203
  %v212 = vmax.f32 %v182, %v204
  %v213 = vmax.f32 %v187, %v205
  %v214 = vmax.f32 %v192, %v206
  %v215 = vmax.f32 %v197, %v207
  %216 = vst.msk [vmem:[#allocation4] sm:$0xff] %vm34, %v208
  %217 = vst.msk [vmem:[#allocation4 + $0x8] sm:$0xff] %vm34, %v209
  %218 = vst.msk [vmem:[#allocation4 + $0x10] sm:$0xff] %vm34, %v210
  %219 = vst.msk [vmem:[#allocation4 + $0x18] sm:$0xff] %vm34, %v211
  %220 = vst.msk [vmem:[#allocation4 + $0x20] sm:$0xff] %vm34, %v212
  %221 = vst.msk [vmem:[#allocation4 + $0x28] sm:$0xff] %vm34, %v213
  %222 = vst.msk [vmem:[#allocation4 + $0x30] sm:$0xff] %vm34, %v214
  %223 = vst.msk [vmem:[#allocation4 + $0x38] sm:$0xff] %vm34, %v215
  %224 = vrot.lane.b32.xlu0 %v208, 32
  %v225 = vpop.permute.xlu0 %224
  %v226 = vsel %vm36, %v225, %v208
  %227 = vrot.lane.b32.xlu0 %v209, 32
  %v228 = vpop.permute.xlu0 %227
  %v229 = vsel %vm36, %v228, %v209
  %230 = vrot.lane.b32.xlu0 %v210, 32
  %v231 = vpop.permute.xlu0 %230
  %v232 = vsel %vm36, %v231, %v210
  %233 = vrot.lane.b32.xlu0 %v211, 32
  %v234 = vpop.permute.xlu0 %233
  %v235 = vsel %vm36, %v234, %v211
  %236 = vrot.lane.b32.xlu0 %v212, 32
  %v237 = vpop.permute.xlu0 %236
  %v238 = vsel %vm36, %v237, %v212
  %239 = vrot.lane.b32.xlu0 %v213, 32
  %v240 = vpop.permute.xlu0 %239
  %v241 = vsel %vm36, %v240, %v213
  %242 = vrot.lane.b32.xlu0 %v214, 32
  %v243 = vpop.permute.xlu0 %242
  %v244 = vsel %vm36, %v243, %v214
  %245 = vrot.lane.b32.xlu0 %v215, 32
  %v246 = vpop.permute.xlu0 %245
  %v247 = vsel %vm36, %v246, %v215
  %248 = vrot.lane.b32.xlu0 %v226, 32
  %v249 = vpop.permute.xlu0 %248
  %250 = vrot.lane.b32.xlu0 %v229, 32
  %v251 = vpop.permute.xlu0 %250
  %252 = vrot.lane.b32.xlu0 %v232, 32
  %v253 = vpop.permute.xlu0 %252
  %254 = vrot.lane.b32.xlu0 %v235, 32
  %v255 = vpop.permute.xlu0 %254
  %256 = vrot.lane.b32.xlu0 %v238, 32
  %v257 = vpop.permute.xlu0 %256
  %258 = vrot.lane.b32.xlu0 %v241, 32
  %v259 = vpop.permute.xlu0 %258
  %260 = vrot.lane.b32.xlu0 %v244, 32
  %v261 = vpop.permute.xlu0 %260
  %262 = vrot.lane.b32.xlu0 %v247, 32
  %v263 = vpop.permute.xlu0 %262
  %v264 = vsel %vm36, %v249, %v208
  %v265 = vsel %vm36, %v251, %v209
  %v266 = vsel %vm36, %v253, %v210
  %v267 = vsel %vm36, %v255, %v211
  %v268 = vsel %vm36, %v257, %v212
  %v269 = vsel %vm36, %v259, %v213
  %v270 = vsel %vm36, %v261, %v214
  %v271 = vsel %vm36, %v263, %v215
  %280 = vrot.lane.b32.xlu0 %v264, 127
  %v281 = vpop.permute.xlu0 %280
  %282 = vrot.lane.b32.xlu0 %v265, 127
  %v283 = vpop.permute.xlu0 %282
  %284 = vrot.lane.b32.xlu0 %v266, 127
  %v285 = vpop.permute.xlu0 %284
  %286 = vrot.lane.b32.xlu0 %v267, 127
  %v287 = vpop.permute.xlu0 %286
  %288 = vrot.lane.b32.xlu0 %v268, 127
  %v289 = vpop.permute.xlu0 %288
  %290 = vrot.lane.b32.xlu0 %v269, 127
  %v291 = vpop.permute.xlu0 %290
  %292 = vrot.lane.b32.xlu0 %v270, 127
  %v293 = vpop.permute.xlu0 %292
  %294 = vrot.lane.b32.xlu0 %v271, 127
  %v295 = vpop.permute.xlu0 %294
  %304 = vst.msk [vmem:[#allocation4 + $0x40] sm:$0xff] %vm34, %v281
  %305 = vst.msk [vmem:[#allocation4 + $0x48] sm:$0xff] %vm34, %v283
  %306 = vst.msk [vmem:[#allocation4 + $0x50] sm:$0xff] %vm34, %v285
  %307 = vst.msk [vmem:[#allocation4 + $0x58] sm:$0xff] %vm34, %v287
  %308 = vst.msk [vmem:[#allocation4 + $0x60] sm:$0xff] %vm34, %v289
  %309 = vst.msk [vmem:[#allocation4 + $0x68] sm:$0xff] %vm34, %v291
  %310 = vst.msk [vmem:[#allocation4 + $0x70] sm:$0xff] %vm34, %v293
  %311 = vst.msk [vmem:[#allocation4 + $0x78] sm:$0xff] %vm34, %v295
  %312 = vrot.lane.b32.xlu0 %v264, 126
  %v313 = vpop.permute.xlu0 %312
  %314 = vrot.lane.b32.xlu0 %v265, 126
  %v315 = vpop.permute.xlu0 %314
  %316 = vrot.lane.b32.xlu0 %v266, 126
  %v317 = vpop.permute.xlu0 %316
  %318 = vrot.lane.b32.xlu0 %v267, 126
  %v319 = vpop.permute.xlu0 %318
  %320 = vrot.lane.b32.xlu0 %v268, 126
  %v321 = vpop.permute.xlu0 %320
  %322 = vrot.lane.b32.xlu0 %v269, 126
  %v323 = vpop.permute.xlu0 %322
  %324 = vrot.lane.b32.xlu0 %v270, 126
  %v325 = vpop.permute.xlu0 %324
  %326 = vrot.lane.b32.xlu0 %v271, 126
  %v327 = vpop.permute.xlu0 %326
  %336 = vst.msk [vmem:[#allocation4 + $0x80] sm:$0xff] %vm34, %v313
  %337 = vst.msk [vmem:[#allocation4 + $0x88] sm:$0xff] %vm34, %v315
  %338 = vst.msk [vmem:[#allocation4 + $0x90] sm:$0xff] %vm34, %v317
  %339 = vst.msk [vmem:[#allocation4 + $0x98] sm:$0xff] %vm34, %v319
  %340 = vst.msk [vmem:[#allocation4 + $0xa0] sm:$0xff] %vm34, %v321
  %341 = vst.msk [vmem:[#allocation4 + $0xa8] sm:$0xff] %vm34, %v323
  %342 = vst.msk [vmem:[#allocation4 + $0xb0] sm:$0xff] %vm34, %v325
  %343 = vst.msk [vmem:[#allocation4 + $0xb8] sm:$0xff] %vm34, %v327
  %v344 = vld [vmem:[#allocation4] sm:$0xff]
  %v345 = vld [vmem:[#allocation4 + $0x8] sm:$0xff]
  %v346 = vld [vmem:[#allocation4 + $0x10] sm:$0xff]
  %v347 = vld [vmem:[#allocation4 + $0x18] sm:$0xff]
  %v348 = vld [vmem:[#allocation4 + $0x20] sm:$0xff]
  %v349 = vld [vmem:[#allocation4 + $0x28] sm:$0xff]
  %v350 = vld [vmem:[#allocation4 + $0x30] sm:$0xff]
  %v351 = vld [vmem:[#allocation4 + $0x38] sm:$0xff]
  %v352 = vld [vmem:[#allocation4 + $0x40] sm:$0xff]
  %v353 = vld [vmem:[#allocation4 + $0x48] sm:$0xff]
  %v354 = vld [vmem:[#allocation4 + $0x50] sm:$0xff]
  %v355 = vld [vmem:[#allocation4 + $0x58] sm:$0xff]
  %v356 = vld [vmem:[#allocation4 + $0x60] sm:$0xff]
  %v357 = vld [vmem:[#allocation4 + $0x68] sm:$0xff]
  %v358 = vld [vmem:[#allocation4 + $0x70] sm:$0xff]
  %v359 = vld [vmem:[#allocation4 + $0x78] sm:$0xff]
  %v360 = vld [vmem:[#allocation4 + $0x80] sm:$0xff]
  %v361 = vld [vmem:[#allocation4 + $0x88] sm:$0xff]
  %v362 = vld [vmem:[#allocation4 + $0x90] sm:$0xff]
  %v363 = vld [vmem:[#allocation4 + $0x98] sm:$0xff]
  %v364 = vld [vmem:[#allocation4 + $0xa0] sm:$0xff]
  %v365 = vld [vmem:[#allocation4 + $0xa8] sm:$0xff]
  %v366 = vld [vmem:[#allocation4 + $0xb0] sm:$0xff]
  %v367 = vld [vmem:[#allocation4 + $0xb8] sm:$0xff]
  %v368 = vld [vmem:[#allocation4 + $0xc0] sm:$0x1]
  %vm369 = vcmask 531456
  %v371 = vsel %vm369, %v33, 0
  %v374 = vsel %vm91, %v368, 0
  %376 = vmatprep.subr.mxu0 0.0
  %377 = vmatpush1.msra.mxu0 %v359
  %378 = vmatprep.subr.mxu0 0.0
  %379 = vmatpush1.msra.mxu0 %v358
  %380 = vmatprep.subr.mxu0 0.0
  %381 = vmatpush1.msra.mxu0 %v357
  %382 = vmatprep.subr.mxu0 0.0
  %383 = vmatpush1.msra.mxu0 %v356
  %384 = vmatprep.subr.mxu0 0.0
  %385 = vmatpush1.msra.mxu0 %v355
  %386 = vmatprep.subr.mxu0 0.0
  %387 = vmatpush1.msra.mxu0 %v354
  %388 = vmatprep.subr.mxu0 0.0
  %389 = vmatpush1.msra.mxu0 %v353
  %390 = vmatprep.subr.mxu0 0.0
  %391 = vmatpush1.msra.mxu0 %v352
  %392 = vmatprep.subr.mxu0 0.0
  %393 = vmatpush1.msra.mxu0 %v351
  %394 = vmatprep.subr.mxu0 0.0
  %395 = vmatpush1.msra.mxu0 %v350
  %396 = vmatprep.subr.mxu0 0.0
  %397 = vmatpush1.msra.mxu0 %v349
  %398 = vmatprep.subr.mxu0 0.0
  %399 = vmatpush1.msra.mxu0 %v348
  %400 = vmatprep.subr.mxu0 0.0
  %401 = vmatpush1.msra.mxu0 %v347
  %402 = vmatprep.subr.mxu0 0.0
  %403 = vmatpush1.msra.mxu0 %v346
  %404 = vmatprep.subr.mxu0 0.0
  %405 = vmatpush1.msra.mxu0 %v345
  %406 = vmatprep.subr.mxu0 0.0
  %407 = vmatpush1.msra.mxu0 %v344
  %408 = vmatprep.subr.mxu0 0.0
  %409 = vmatpush2.msra.mxu0 0.0
  %410 = vmatprep.subr.mxu0 0.0
  %411 = vmatpush2.msra.mxu0 0.0
  %412 = vmatprep.subr.mxu0 0.0
  %413 = vmatpush2.msra.mxu0 0.0
  %414 = vmatprep.subr.mxu0 0.0
  %415 = vmatpush2.msra.mxu0 0.0
  %416 = vmatprep.subr.mxu0 0.0
  %417 = vmatpush2.msra.mxu0 0.0
  %418 = vmatprep.subr.mxu0 0.0
  %419 = vmatpush2.msra.mxu0 0.0
  %420 = vmatprep.subr.mxu0 0.0
  %421 = vmatpush2.msra.mxu0 0.0
  %422 = vmatprep.subr.mxu0 0.0
  %423 = vmatpush2.msra.mxu0 %v374
  %424 = vmatprep.subr.mxu0 0.0
  %425 = vmatpush2.msra.mxu0 %v367
  %426 = vmatprep.subr.mxu0 0.0
  %427 = vmatpush2.msra.mxu0 %v366
  %428 = vmatprep.subr.mxu0 0.0
  %429 = vmatpush2.msra.mxu0 %v365
  %430 = vmatprep.subr.mxu0 0.0
  %431 = vmatpush2.msra.mxu0 %v364
  %432 = vmatprep.subr.mxu0 0.0
  %433 = vmatpush2.msra.mxu0 %v363
  %434 = vmatprep.subr.mxu0 0.0
  %435 = vmatpush2.msra.mxu0 %v362
  %436 = vmatprep.subr.mxu0 0.0
  %437 = vmatpush2.msra.mxu0 %v361
  %438 = vmatprep.subr.mxu0 0.0
  %439 = vmatpush2.msra.mxu0 %v360
  %440 = vmatprep.mubr.f32.mxu0 %v371
  %441 = vmatmul.mubr.f32.gmra.mxu0 %v32
  %v442 = vpop.f32.mrf.mxu0
  %v443 = vadd.f32 0.0, %v442
  %v444 = vpop.f32.mrf.mxu0
  %445 = vdwg.mxu0
  %v446 = vtanh.pop %v443
  %v447 = vmul.f32 %v446, 1.442695
  %v448 = vpow.pop %v447
  %v449 = vmul.f32 %v15, %v448
  %450 = vrot.lane.b32.xlu0 %v449, 32
  %v451 = vpop.permute.xlu0 %450
  %v452 = vsel %vm36, %v451, %v449
  %453 = vrot.lane.b32.xlu0 %v452, 32
  %v454 = vpop.permute.xlu0 %453
  %v455 = vsel %vm36, %v454, %v449
  %457 = vrot.lane.b32.xlu0 %v455, 99
  %v458 = vpop.permute.xlu0 %457
  %460 = vst.msk [vmem:[#allocation2] sm:$0xff] %vm34, %v458
  %462 = vset.pattern.permute.xlu0 0
  %463 = vperm.xlu0 %462, %v449
  %v464 = vpop.permute.xlu0 %463
  %vm466 = vcmask 23552
  %467 = vst.msk [vmem:[#allocation2] sm:$0xff] %vm466, %v464
  %468 = vset.pattern.permute.xlu0 7
  %469 = vperm.xlu0 %468, %v449
  %v470 = vpop.permute.xlu0 %469
  %vm472 = vcmask 130136
  %473 = vst.msk [vmem:[#allocation2] sm:$0xff] %vm472, %v470
  %474 = vset.pattern.permute.xlu0 16
  %475 = vperm.xlu0 %474, %v449
  %v476 = vpop.permute.xlu0 %475
  %vm478 = vcmask 154752
  %479 = vst.msk [vmem:[#allocation2] sm:$0xff] %vm478, %v476
  %480 = vset.pattern.permute.xlu0 23
  %481 = vperm.xlu0 %480, %v449
  %v482 = vpop.permute.xlu0 %481
  %vm484 = vcmask 261336
  %485 = vst.msk [vmem:[#allocation2] sm:$0xff] %vm484, %v482
  %v486 = vld [vmem:[#allocation2] sm:$0xff]
  %v487 = vld [vmem:[%s1 + $0x10] sm:$0xff]
  %v488 = vld [vmem:[%s1 + $0x18] sm:$0xff]
  %489 = vst.msk [vmem:[#allocation3] sm:$0xff] %vm34, %v486
  %490 = vrot.lane.b32.xlu0 %v486, 32
  %v491 = vpop.permute.xlu0 %490
  %v492 = vsel %vm36, %v491, %v486
  %493 = vrot.lane.b32.xlu0 %v492, 32
  %v494 = vpop.permute.xlu0 %493
  %v495 = vsel %vm36, %v494, %v486
  %497 = vrot.lane.b32.xlu0 %v495, 127
  %v498 = vpop.permute.xlu0 %497
  %500 = vst.msk [vmem:[#allocation3 + $0x8] sm:$0xff] %vm34, %v498
  %501 = vrot.lane.b32.xlu0 %v495, 126
  %v502 = vpop.permute.xlu0 %501
  %504 = vst.msk [vmem:[#allocation3 + $0x10] sm:$0xff] %vm34, %v502
  %505 = vrot.lane.b32.xlu0 %v495, 125
  %v506 = vpop.permute.xlu0 %505
  %508 = vst.msk [vmem:[#allocation3 + $0x18] sm:$0xff] %vm34, %v506
  %509 = vrot.lane.b32.xlu0 %v495, 124
  %v510 = vpop.permute.xlu0 %509
  %512 = vst.msk [vmem:[#allocation3 + $0x20] sm:$0xff] %vm34, %v510
  %v513 = vld [vmem:[#allocation3] sm:$0xff]
  %v514 = vld [vmem:[#allocation3 + $0x8] sm:$0xff]
  %v515 = vld [vmem:[#allocation3 + $0x10] sm:$0xff]
  %v516 = vld [vmem:[#allocation3 + $0x18] sm:$0xff]
  %v517 = vld [vmem:[#allocation3 + $0x20] sm:$0xff]
  %v518 = vld [vmem:[#allocation3 + $0x28] sm:$0x1]
  %v520 = vsel %vm66, %v24, 0
  %v523 = vsel %vm66, %v25, 0
  %v526 = vsel %vm66, %v26, 0
  %v529 = vsel %vm66, %v27, 0
  %v532 = vsel %vm66, %v28, 0
  %v535 = vsel %vm66, %v29, 0
  %v538 = vsel %vm66, %v30, 0
  %v541 = vsel %vm66, %v31, 0
  %v544 = vsel %vm91, %v518, 0
  %546 = vmatprep.subr.mxu0 0.0
  %547 = vmatpush1.msra.mxu0 0.0
  %548 = vmatprep.subr.mxu0 0.0
  %549 = vmatpush1.msra.mxu0 0.0
  %550 = vmatprep.subr.mxu0 0.0
  %551 = vmatpush1.msra.mxu0 0.0
  %552 = vmatprep.subr.mxu0 0.0
  %553 = vmatpush1.msra.mxu0 0.0
  %554 = vmatprep.subr.mxu0 0.0
  %555 = vmatpush1.msra.mxu0 0.0
  %556 = vmatprep.subr.mxu0 0.0
  %557 = vmatpush1.msra.mxu0 0.0
  %558 = vmatprep.subr.mxu0 0.0
  %559 = vmatpush1.msra.mxu0 0.0
  %560 = vmatprep.subr.mxu0 0.0
  %561 = vmatpush1.msra.mxu0 0.0
  %562 = vmatprep.subr.mxu0 0.0
  %563 = vmatpush1.msra.mxu0 0.0
  %564 = vmatprep.subr.mxu0 0.0
  %565 = vmatpush1.msra.mxu0 0.0
  %566 = vmatprep.subr.mxu0 0.0
  %567 = vmatpush1.msra.mxu0 %v544
  %568 = vmatprep.subr.mxu0 0.0
  %569 = vmatpush1.msra.mxu0 %v517
  %570 = vmatprep.subr.mxu0 0.0
  %571 = vmatpush1.msra.mxu0 %v516
  %572 = vmatprep.subr.mxu0 0.0
  %573 = vmatpush1.msra.mxu0 %v515
  %574 = vmatprep.subr.mxu0 0.0
  %575 = vmatpush1.msra.mxu0 %v514
  %576 = vmatprep.subr.mxu0 0.0
  %577 = vmatpush1.msra.mxu0 %v513
  %578 = vmatprep.subr.mxu0 0.0
  %579 = vmatpush2.msra.mxu0 0.0
  %580 = vmatprep.subr.mxu0 0.0
  %581 = vmatpush2.msra.mxu0 0.0
  %582 = vmatprep.subr.mxu0 0.0
  %583 = vmatpush2.msra.mxu0 0.0
  %584 = vmatprep.subr.mxu0 0.0
  %585 = vmatpush2.msra.mxu0 0.0
  %586 = vmatprep.subr.mxu0 0.0
  %587 = vmatpush2.msra.mxu0 0.0
  %588 = vmatprep.subr.mxu0 0.0
  %589 = vmatpush2.msra.mxu0 0.0
  %590 = vmatprep.subr.mxu0 0.0
  %591 = vmatpush2.msra.mxu0 0.0
  %592 = vmatprep.subr.mxu0 0.0
  %593 = vmatpush2.msra.mxu0 0.0
  %594 = vmatprep.subr.mxu0 0.0
  %595 = vmatpush2.msra.mxu0 0.0
  %596 = vmatprep.subr.mxu0 0.0
  %597 = vmatpush2.msra.mxu0 0.0
  %598 = vmatprep.subr.mxu0 0.0
  %599 = vmatpush2.msra.mxu0 0.0
  %600 = vmatprep.subr.mxu0 0.0
  %601 = vmatpush2.msra.mxu0 0.0
  %602 = vmatprep.subr.mxu0 0.0
  %603 = vmatpush2.msra.mxu0 0.0
  %604 = vmatprep.subr.mxu0 0.0
  %605 = vmatpush2.msra.mxu0 0.0
  %606 = vmatprep.subr.mxu0 0.0
  %607 = vmatpush2.msra.mxu0 0.0
  %608 = vmatprep.subr.mxu0 0.0
  %609 = vmatpush2.msra.mxu0 0.0
  %610 = vmatprep.mubr.f32.mxu0 0.0
  %611 = vmatmul.mubr.f32.gmra.mxu0 %v520
  %v612 = vpop.f32.mrf.mxu0
  %v613 = vadd.f32 0.0, %v612
  %v614 = vpop.f32.mrf.mxu0
  %615 = vmatprep.mubr.f32.mxu0 0.0
  %616 = vmatmul.mubr.f32.gmra.mxu0 %v523
  %v617 = vpop.f32.mrf.mxu0
  %v618 = vadd.f32 0.0, %v617
  %v619 = vpop.f32.mrf.mxu0
  %620 = vmatprep.mubr.f32.mxu0 0.0
  %621 = vmatmul.mubr.f32.gmra.mxu0 %v526
  %v622 = vpop.f32.mrf.mxu0
  %v623 = vadd.f32 0.0, %v622
  %v624 = vpop.f32.mrf.mxu0
  %625 = vmatprep.mubr.f32.mxu0 0.0
  %626 = vmatmul.mubr.f32.gmra.mxu0 %v529
  %v627 = vpop.f32.mrf.mxu0
  %v628 = vadd.f32 0.0, %v627
  %v629 = vpop.f32.mrf.mxu0
  %630 = vmatprep.mubr.f32.mxu0 0.0
  %631 = vmatmul.mubr.f32.gmra.mxu0 %v532
  %v632 = vpop.f32.mrf.mxu0
  %v633 = vadd.f32 0.0, %v632
  %v634 = vpop.f32.mrf.mxu0
  %635 = vmatprep.mubr.f32.mxu0 0.0
  %636 = vmatmul.mubr.f32.gmra.mxu0 %v535
  %v637 = vpop.f32.mrf.mxu0
  %v638 = vadd.f32 0.0, %v637
  %v639 = vpop.f32.mrf.mxu0
  %640 = vmatprep.mubr.f32.mxu0 0.0
  %641 = vmatmul.mubr.f32.gmra.mxu0 %v538
  %v642 = vpop.f32.mrf.mxu0
  %v643 = vadd.f32 0.0, %v642
  %v644 = vpop.f32.mrf.mxu0
  %645 = vmatprep.mubr.f32.mxu0 0.0
  %646 = vmatmul.mubr.f32.gmra.mxu0 %v541
  %v647 = vpop.f32.mrf.mxu0
  %v648 = vadd.f32 0.0, %v647
  %v649 = vpop.f32.mrf.mxu0
  %650 = vdwg.mxu0
  %v651 = vmul.f32 %v613, 0.01
  %v652 = vmul.f32 %v618, 0.01
  %v653 = vmul.f32 %v623, 0.01
  %v654 = vmul.f32 %v628, 0.01
  %v655 = vmul.f32 %v633, 0.01
  %v656 = vmul.f32 %v638, 0.01
  %v657 = vmul.f32 %v643, 0.01
  %v658 = vmul.f32 %v648, 0.01
  %v659 = vmax.f32 %v613, %v651
  %v660 = vmax.f32 %v618, %v652
  %v661 = vmax.f32 %v623, %v653
  %v662 = vmax.f32 %v628, %v654
  %v663 = vmax.f32 %v633, %v655
  %v664 = vmax.f32 %v638, %v656
  %v665 = vmax.f32 %v643, %v657
  %v666 = vmax.f32 %v648, %v658
  %667 = vst.msk [vmem:[#allocation4] sm:$0xff] %vm34, %v659
  %668 = vst.msk [vmem:[#allocation4 + $0x8] sm:$0xff] %vm34, %v660
  %669 = vst.msk [vmem:[#allocation4 + $0x10] sm:$0xff] %vm34, %v661
  %670 = vst.msk [vmem:[#allocation4 + $0x18] sm:$0xff] %vm34, %v662
  %671 = vst.msk [vmem:[#allocation4 + $0x20] sm:$0xff] %vm34, %v663
  %672 = vst.msk [vmem:[#allocation4 + $0x28] sm:$0xff] %vm34, %v664
  %673 = vst.msk [vmem:[#allocation4 + $0x30] sm:$0xff] %vm34, %v665
  %674 = vst.msk [vmem:[#allocation4 + $0x38] sm:$0xff] %vm34, %v666
  %675 = vrot.lane.b32.xlu0 %v659, 32
  %v676 = vpop.permute.xlu0 %675
  %v677 = vsel %vm36, %v676, %v659
  %678 = vrot.lane.b32.xlu0 %v660, 32
  %v679 = vpop.permute.xlu0 %678
  %v680 = vsel %vm36, %v679, %v660
  %681 = vrot.lane.b32.xlu0 %v661, 32
  %v682 = vpop.permute.xlu0 %681
  %v683 = vsel %vm36, %v682, %v661
  %684 = vrot.lane.b32.xlu0 %v662, 32
  %v685 = vpop.permute.xlu0 %684
  %v686 = vsel %vm36, %v685, %v662
  %687 = vrot.lane.b32.xlu0 %v663, 32
  %v688 = vpop.permute.xlu0 %687
  %v689 = vsel %vm36, %v688, %v663
  %690 = vrot.lane.b32.xlu0 %v664, 32
  %v691 = vpop.permute.xlu0 %690
  %v692 = vsel %vm36, %v691, %v664
  %693 = vrot.lane.b32.xlu0 %v665, 32
  %v694 = vpop.permute.xlu0 %693
  %v695 = vsel %vm36, %v694, %v665
  %696 = vrot.lane.b32.xlu0 %v666, 32
  %v697 = vpop.permute.xlu0 %696
  %v698 = vsel %vm36, %v697, %v666
  %699 = vrot.lane.b32.xlu0 %v677, 32
  %v700 = vpop.permute.xlu0 %699
  %701 = vrot.lane.b32.xlu0 %v680, 32
  %v702 = vpop.permute.xlu0 %701
  %703 = vrot.lane.b32.xlu0 %v683, 32
  %v704 = vpop.permute.xlu0 %703
  %705 = vrot.lane.b32.xlu0 %v686, 32
  %v706 = vpop.permute.xlu0 %705
  %707 = vrot.lane.b32.xlu0 %v689, 32
  %v708 = vpop.permute.xlu0 %707
  %709 = vrot.lane.b32.xlu0 %v692, 32
  %v710 = vpop.permute.xlu0 %709
  %711 = vrot.lane.b32.xlu0 %v695, 32
  %v712 = vpop.permute.xlu0 %711
  %713 = vrot.lane.b32.xlu0 %v698, 32
  %v714 = vpop.permute.xlu0 %713
  %v715 = vsel %vm36, %v700, %v659
  %v716 = vsel %vm36, %v702, %v660
  %v717 = vsel %vm36, %v704, %v661
  %v718 = vsel %vm36, %v706, %v662
  %v719 = vsel %vm36, %v708, %v663
  %v720 = vsel %vm36, %v710, %v664
  %v721 = vsel %vm36, %v712, %v665
  %v722 = vsel %vm36, %v714, %v666
  %731 = vrot.lane.b32.xlu0 %v715, 127
  %v732 = vpop.permute.xlu0 %731
  %733 = vrot.lane.b32.xlu0 %v716, 127
  %v734 = vpop.permute.xlu0 %733
  %735 = vrot.lane.b32.xlu0 %v717, 127
  %v736 = vpop.permute.xlu0 %735
  %737 = vrot.lane.b32.xlu0 %v718, 127
  %v738 = vpop.permute.xlu0 %737
  %739 = vrot.lane.b32.xlu0 %v719, 127
  %v740 = vpop.permute.xlu0 %739
  %741 = vrot.lane.b32.xlu0 %v720, 127
  %v742 = vpop.permute.xlu0 %741
  %743 = vrot.lane.b32.xlu0 %v721, 127
  %v744 = vpop.permute.xlu0 %743
  %745 = vrot.lane.b32.xlu0 %v722, 127
  %v746 = vpop.permute.xlu0 %745
  %755 = vst.msk [vmem:[#allocation4 + $0x40] sm:$0xff] %vm34, %v732
  %756 = vst.msk [vmem:[#allocation4 + $0x48] sm:$0xff] %vm34, %v734
  %757 = vst.msk [vmem:[#allocation4 + $0x50] sm:$0xff] %vm34, %v736
  %758 = vst.msk [vmem:[#allocation4 + $0x58] sm:$0xff] %vm34, %v738
  %759 = vst.msk [vmem:[#allocation4 + $0x60] sm:$0xff] %vm34, %v740
  %760 = vst.msk [vmem:[#allocation4 + $0x68] sm:$0xff] %vm34, %v742
  %761 = vst.msk [vmem:[#allocation4 + $0x70] sm:$0xff] %vm34, %v744
  %762 = vst.msk [vmem:[#allocation4 + $0x78] sm:$0xff] %vm34, %v746
  %763 = vrot.lane.b32.xlu0 %v715, 126
  %v764 = vpop.permute.xlu0 %763
  %765 = vrot.lane.b32.xlu0 %v716, 126
  %v766 = vpop.permute.xlu0 %765
  %767 = vrot.lane.b32.xlu0 %v717, 126
  %v768 = vpop.permute.xlu0 %767
  %769 = vrot.lane.b32.xlu0 %v718, 126
  %v770 = vpop.permute.xlu0 %769
  %771 = vrot.lane.b32.xlu0 %v719, 126
  %v772 = vpop.permute.xlu0 %771
  %773 = vrot.lane.b32.xlu0 %v720, 126
  %v774 = vpop.permute.xlu0 %773
  %775 = vrot.lane.b32.xlu0 %v721, 126
  %v776 = vpop.permute.xlu0 %775
  %777 = vrot.lane.b32.xlu0 %v722, 126
  %v778 = vpop.permute.xlu0 %777
  %787 = vst.msk [vmem:[#allocation4 + $0x80] sm:$0xff] %vm34, %v764
  %788 = vst.msk [vmem:[#allocation4 + $0x88] sm:$0xff] %vm34, %v766
  %789 = vst.msk [vmem:[#allocation4 + $0x90] sm:$0xff] %vm34, %v768
  %790 = vst.msk [vmem:[#allocation4 + $0x98] sm:$0xff] %vm34, %v770
  %791 = vst.msk [vmem:[#allocation4 + $0xa0] sm:$0xff] %vm34, %v772
  %792 = vst.msk [vmem:[#allocation4 + $0xa8] sm:$0xff] %vm34, %v774
  %793 = vst.msk [vmem:[#allocation4 + $0xb0] sm:$0xff] %vm34, %v776
  %794 = vst.msk [vmem:[#allocation4 + $0xb8] sm:$0xff] %vm34, %v778
  %v795 = vld [vmem:[#allocation4] sm:$0xff]
  %v796 = vld [vmem:[#allocation4 + $0x8] sm:$0xff]
  %v797 = vld [vmem:[#allocation4 + $0x10] sm:$0xff]
  %v798 = vld [vmem:[#allocation4 + $0x18] sm:$0xff]
  %v799 = vld [vmem:[#allocation4 + $0x20] sm:$0xff]
  %v800 = vld [vmem:[#allocation4 + $0x28] sm:$0xff]
  %v801 = vld [vmem:[#allocation4 + $0x30] sm:$0xff]
  %v802 = vld [vmem:[#allocation4 + $0x38] sm:$0xff]
  %v803 = vld [vmem:[#allocation4 + $0x40] sm:$0xff]
  %v804 = vld [vmem:[#allocation4 + $0x48] sm:$0xff]
  %v805 = vld [vmem:[#allocation4 + $0x50] sm:$0xff]
  %v806 = vld [vmem:[#allocation4 + $0x58] sm:$0xff]
  %v807 = vld [vmem:[#allocation4 + $0x60] sm:$0xff]
  %v808 = vld [vmem:[#allocation4 + $0x68] sm:$0xff]
  %v809 = vld [vmem:[#allocation4 + $0x70] sm:$0xff]
  %v810 = vld [vmem:[#allocation4 + $0x78] sm:$0xff]
  %v811 = vld [vmem:[#allocation4 + $0x80] sm:$0xff]
  %v812 = vld [vmem:[#allocation4 + $0x88] sm:$0xff]
  %v813 = vld [vmem:[#allocation4 + $0x90] sm:$0xff]
  %v814 = vld [vmem:[#allocation4 + $0x98] sm:$0xff]
  %v815 = vld [vmem:[#allocation4 + $0xa0] sm:$0xff]
  %v816 = vld [vmem:[#allocation4 + $0xa8] sm:$0xff]
  %v817 = vld [vmem:[#allocation4 + $0xb0] sm:$0xff]
  %v818 = vld [vmem:[#allocation4 + $0xb8] sm:$0xff]
  %v819 = vld [vmem:[#allocation4 + $0xc0] sm:$0x1]
  %v821 = vsel %vm369, %v488, 0
  %v824 = vsel %vm91, %v819, 0
  %826 = vmatprep.subr.mxu0 0.0
  %827 = vmatpush1.msra.mxu0 %v810
  %828 = vmatprep.subr.mxu0 0.0
  %829 = vmatpush1.msra.mxu0 %v809
  %830 = vmatprep.subr.mxu0 0.0
  %831 = vmatpush1.msra.mxu0 %v808
  %832 = vmatprep.subr.mxu0 0.0
  %833 = vmatpush1.msra.mxu0 %v807
  %834 = vmatprep.subr.mxu0 0.0
  %835 = vmatpush1.msra.mxu0 %v806
  %836 = vmatprep.subr.mxu0 0.0
  %837 = vmatpush1.msra.mxu0 %v805
  %838 = vmatprep.subr.mxu0 0.0
  %839 = vmatpush1.msra.mxu0 %v804
  %840 = vmatprep.subr.mxu0 0.0
  %841 = vmatpush1.msra.mxu0 %v803
  %842 = vmatprep.subr.mxu0 0.0
  %843 = vmatpush1.msra.mxu0 %v802
  %844 = vmatprep.subr.mxu0 0.0
  %845 = vmatpush1.msra.mxu0 %v801
  %846 = vmatprep.subr.mxu0 0.0
  %847 = vmatpush1.msra.mxu0 %v800
  %848 = vmatprep.subr.mxu0 0.0
  %849 = vmatpush1.msra.mxu0 %v799
  %850 = vmatprep.subr.mxu0 0.0
  %851 = vmatpush1.msra.mxu0 %v798
  %852 = vmatprep.subr.mxu0 0.0
  %853 = vmatpush1.msra.mxu0 %v797
  %854 = vmatprep.subr.mxu0 0.0
  %855 = vmatpush1.msra.mxu0 %v796
  %856 = vmatprep.subr.mxu0 0.0
  %857 = vmatpush1.msra.mxu0 %v795
  %858 = vmatprep.subr.mxu0 0.0
  %859 = vmatpush2.msra.mxu0 0.0
  %860 = vmatprep.subr.mxu0 0.0
  %861 = vmatpush2.msra.mxu0 0.0
  %862 = vmatprep.subr.mxu0 0.0
  %863 = vmatpush2.msra.mxu0 0.0
  %864 = vmatprep.subr.mxu0 0.0
  %865 = vmatpush2.msra.mxu0 0.0
  %866 = vmatprep.subr.mxu0 0.0
  %867 = vmatpush2.msra.mxu0 0.0
  %868 = vmatprep.subr.mxu0 0.0
  %869 = vmatpush2.msra.mxu0 0.0
  %870 = vmatprep.subr.mxu0 0.0
  %871 = vmatpush2.msra.mxu0 0.0
  %872 = vmatprep.subr.mxu0 0.0
  %873 = vmatpush2.msra.mxu0 %v824
  %874 = vmatprep.subr.mxu0 0.0
  %875 = vmatpush2.msra.mxu0 %v818
  %876 = vmatprep.subr.mxu0 0.0
  %877 = vmatpush2.msra.mxu0 %v817
  %878 = vmatprep.subr.mxu0 0.0
  %879 = vmatpush2.msra.mxu0 %v816
  %880 = vmatprep.subr.mxu0 0.0
  %881 = vmatpush2.msra.mxu0 %v815
  %882 = vmatprep.subr.mxu0 0.0
  %883 = vmatpush2.msra.mxu0 %v814
  %884 = vmatprep.subr.mxu0 0.0
  %885 = vmatpush2.msra.mxu0 %v813
  %886 = vmatprep.subr.mxu0 0.0
  %887 = vmatpush2.msra.mxu0 %v812
  %888 = vmatprep.subr.mxu0 0.0
  %889 = vmatpush2.msra.mxu0 %v811
  %890 = vmatprep.mubr.f32.mxu0 %v821
  %891 = vmatmul.mubr.f32.gmra.mxu0 %v487
  %v892 = vpop.f32.mrf.mxu0
  %v893 = vadd.f32 0.0, %v892
  %v894 = vpop.f32.mrf.mxu0
  %895 = vdwg.mxu0
  %v896 = vtanh.pop %v893
  %v897 = vadd.f32 %v449, %v896
  %898 = vst.msk [vmem:[%s2] sm:$0xff] %vm34, %v897
  // Predicated region
  $region10: #{interactor_forward.1} parent=0 // pred_check
    _
  $region11: #{interactor_forward.1} parent=0 // pred_check_branch
    %900 = sbr.rel (0) target = $region13
  $region12: #{interactor_forward.1} parent=0 // pred_region
    _
  $region13: #{interactor_forward.1} parent=0 // pred_fallthru
    _
  // Predicated region
  $region14: #{interactor_forward.1} parent=0 // pred_check
    _
  $region15: #{interactor_forward.1} parent=0 // pred_check_branch
    %902 = sbr.rel (0) target = $region17
  $region16: #{interactor_forward.1} parent=0 // pred_region
    _
  $region17: #{interactor_forward.1} parent=0 // pred_fallthru
    _

</llo_original>
